<compile_context>
chip_gen: v6e
topology: v6e:2x2x1
jax: 0.10.0
libtpu: 0.0.40
codegen_flags: <defaults>
</compile_context>

<pallas_src>
import functools

import jax
import jax.numpy as jnp
from jax import lax
from jax.experimental import pallas as pl
from jax.experimental.pallas import tpu as pltpu


def lstm_chunk_kernel(gx_ref,    # (TC, BB, 4H) pre-projected input gates chunk
                      h0_ref,    # (BB, H)      initial hidden state (batch block)
                      c0_ref,    # (BB, H)      initial cell state
                      w_hh_ref,  # (H, 4H)      recurrent weights (pre-transposed)
                      hs_ref,    # (TC, BB, H)  output hidden states for this chunk
                      h_scr,     # VMEM (BB, H) f32 persistent hidden carry
                      c_scr,     # VMEM (BB, H) f32 persistent cell carry
                      *, unroll):
    ti = pl.program_id(1)        # time-chunk index (grid axis 1, "arbitrary")

    # New batch block starts: (re)load initial state into the persistent carry.
    @pl.when(ti == 0)
    def _():
        h_scr[...] = h0_ref[...].astype(jnp.float32)
        c_scr[...] = c0_ref[...].astype(jnp.float32)

    H = h0_ref.shape[1]
    tc = gx_ref.shape[0]
    w_hh = w_hh_ref[...]         # loop-invariant, kept resident (f32 or bf16)

    def step(t, carry):
        h_prev, c_prev = carry   # f32 vreg-carried state
        gates = gx_ref[t].astype(jnp.float32) + jnp.dot(
            h_prev.astype(w_hh.dtype), w_hh,
            preferred_element_type=jnp.float32)              # (BB, 4H) f32

        # Sliced EUP passes: sigmoid only where needed, tanh only on g.
        # Gate / cell math stays f32 (v5e has no bf16 VPU/EUP).
        if_g = jax.nn.sigmoid(gates[:, :2 * H])              # i | f
        g_g = jnp.tanh(gates[:, 2 * H:3 * H])                # g
        o_g = jax.nn.sigmoid(gates[:, 3 * H:])               # o

        c_new = if_g[:, H:] * c_prev + if_g[:, :H] * g_g
        h_new = o_g * jnp.tanh(c_new)

        hs_ref[t] = h_new.astype(hs_ref.dtype)
        return h_new, c_new

    h_fin, c_fin = lax.fori_loop(0, tc, step, (h_scr[...], c_scr[...]),
                                 unroll=unroll)

    # Persist carry for the next time-chunk of this batch block.
    h_scr[...] = h_fin
    c_scr[...] = c_fin


def pack_params(params, compute_dtype=jnp.float32):
    """One-time repack of torch-style LSTM + FC params into kernel layout.

    compute_dtype controls the dtype of the MXU matmul operands (w_ih, w_hh);
    biases, gate math and accumulation always stay float32.
    """
    H = params["w_hh"].shape[1]          # w_hh: (4H, H)
    O = params["w_fc"].shape[1]
    return {
        "w_ih_t": params["w_ih"].T.astype(compute_dtype),            # (D, 4H)
        "w_hh_t": params["w_hh"].T.astype(compute_dtype),            # (H, 4H)
        "b": (params["b_ih"] + params["b_hh"]).reshape(1, 4 * H)
             .astype(jnp.float32),                                   # (1, 4H)
        "w_fc": params["w_fc"].astype(jnp.float32),                  # (H, O)
        "b_fc": params["b_fc"].reshape(1, O).astype(jnp.float32),    # (1, O)
    }


@functools.partial(jax.jit, static_argnames=("t_chunk", "b_block", "unroll"))
def lstm_seq2seq_same(x, hidden_state, cell_state, packed,
                      *, t_chunk=4, b_block=8, unroll=4):
    """x: (T, B, D); hidden_state/cell_state: (1, B, H). Returns (T, B, O)."""
    T, B, D = x.shape
    H = packed["w_hh_t"].shape[0]
    O = packed["w_fc"].shape[1]

    assert B % 8 == 0, "batch must be a multiple of 8 (sublane width)"
    b_block = min(b_block, B)
    t_chunk = min(t_chunk, T)
    assert B % b_block == 0 and T % t_chunk == 0

    # ---- Input projection hoisted to XLA: one big (T*B, D) @ (D, 4H) GEMM,
    #      f32 accumulation, result streamed into the kernel per time-chunk.
    cd = packed["w_ih_t"].dtype
    gx = (jnp.dot(x.reshape(T * B, D).astype(cd), packed["w_ih_t"],
                  preferred_element_type=jnp.float32)
          + packed["b"]).reshape(T, B, 4 * H)

    grid = (B // b_block, T // t_chunk)   # (parallel batch blocks, serial time)

    hs = pl.pallas_call(
        functools.partial(lstm_chunk_kernel, unroll=unroll),
        out_shape=jax.ShapeDtypeStruct((T, B, H), jnp.float32),
        grid_spec=pltpu.PrefetchScalarGridSpec(
            num_scalar_prefetch=0,
            grid=grid,
            in_specs=[
                pl.BlockSpec((t_chunk, b_block, 4 * H),
                             lambda bi, ti: (ti, bi, 0)),    # gx chunk (streamed)
                pl.BlockSpec((b_block, H), lambda bi, ti: (bi, 0)),  # h0 block
                pl.BlockSpec((b_block, H), lambda bi, ti: (bi, 0)),  # c0 block
                pl.BlockSpec((H, 4 * H), lambda bi, ti: (0, 0)),     # W_hh^T
            ],
            out_specs=pl.BlockSpec((t_chunk, b_block, H),
                                   lambda bi, ti: (ti, bi, 0)),      # hs chunk
            scratch_shapes=[
                pltpu.VMEM((b_block, H), jnp.float32),   # persistent h carry
                pltpu.VMEM((b_block, H), jnp.float32),   # persistent c carry
            ],
        ),
        compiler_params=pltpu.CompilerParams(
            dimension_semantics=("parallel", "arbitrary"),
            vmem_limit_bytes=48 * 1024 * 1024,   # explicit; fits v7x 64 MiB VMEM
        ),
    )(gx, hidden_state[0], cell_state[0], packed["w_hh_t"])

    # ---- Lane-dense epilogue: the O=1 FC stays in XLA (avoids a last-dim-1
    #      masked-store out_spec inside the kernel).
    out = (hs.reshape(T * B, H) @ packed["w_fc"] + packed["b_fc"]).reshape(T, B, O)
    return out


def reference_lstm_seq2seq_same(x, hidden_state, cell_state, params):
    """Pure-JAX reference (mirrors torch nn.LSTM single layer + fc)."""
    H = params["w_hh"].shape[1]
    w_ih_t = params["w_ih"].T
    w_hh_t = params["w_hh"].T
    b = params["b_ih"] + params["b_hh"]

    def step(carry, x_t):
        h, c = carry
        gates = x_t @ w_ih_t + h @ w_hh_t + b
        i = jax.nn.sigmoid(gates[:, 0 * H:1 * H])
        f = jax.nn.sigmoid(gates[:, 1 * H:2 * H])
        g = jnp.tanh(gates[:, 2 * H:3 * H])
        o = jax.nn.sigmoid(gates[:, 3 * H:4 * H])
        c_new = f * c + i * g
        h_new = o * jnp.tanh(c_new)
        return (h_new, c_new), h_new

    (_, _), hs = lax.scan(step, (hidden_state[0], cell_state[0]), x)
    return hs @ params["w_fc"] + params["b_fc"]


def init_params(key, input_dim, hidden_dim, output_dim):
    """Deterministic init (uniform +-1/sqrt(hidden_dim), like torch LSTM)."""
    ks = jax.random.split(key, 6)
    s = 1.0 / jnp.sqrt(hidden_dim)
    return {
        "w_ih": jax.random.uniform(ks[0], (4 * hidden_dim, input_dim),
                                   jnp.float32, -s, s),
        "w_hh": jax.random.uniform(ks[1], (4 * hidden_dim, hidden_dim),
                                   jnp.float32, -s, s),
        "b_ih": jax.random.uniform(ks[2], (4 * hidden_dim,),
                                   jnp.float32, -s, s),
        "b_hh": jax.random.uniform(ks[3], (4 * hidden_dim,),
                                   jnp.float32, -s, s),
        "w_fc": jax.random.uniform(ks[4], (hidden_dim, output_dim),
                                   jnp.float32, -s, s),
        "b_fc": jax.random.uniform(ks[5], (output_dim,),
                                   jnp.float32, -s, s),
    }


if __name__ == "__main__":
    # Small shapes: seq=8, batch=16, input_dim=16, hidden_dim=32, output_dim=1
    # (batch=16 with b_block=8 exercises the batch-parallel grid axis;
    #  t_chunk=4 exercises the h/c carry across time chunks).
    T, B, D, H, O = 8, 16, 16, 32, 1

    key = jax.random.PRNGKey(0)
    k_x, k_h, k_c, k_p = jax.random.split(key, 4)

    x = jax.random.normal(k_x, (T, B, D), jnp.float32)
    hidden_state = jax.random.normal(k_h, (1, B, H), jnp.float32)
    cell_state = jax.random.normal(k_c, (1, B, H), jnp.float32)
    params = init_params(k_p, D, H, O)

    ref = reference_lstm_seq2seq_same(x, hidden_state, cell_state, params)

    # --- f32 path (strict check vs reference) ---
    packed_f32 = pack_params(params, jnp.float32)
    out = lstm_seq2seq_same(x, hidden_state, cell_state, packed_f32,
                            t_chunk=4, b_block=8, unroll=4)
    out = jax.block_until_ready(out)
    assert out.shape == (T, B, O)
    assert jnp.allclose(out, ref, atol=1e-5, rtol=1e-5), "f32 mismatch vs reference"

    # --- bf16 matmul-operand path (v6e/v7x MXU; f32 accumulation & gate math;
    #     loose tolerance vs the f32 reference) ---
    packed_bf16 = pack_params(params, jnp.bfloat16)
    out_bf16 = lstm_seq2seq_same(x, hidden_state, cell_state, packed_bf16,
                                 t_chunk=4, b_block=8, unroll=4)
    out_bf16 = jax.block_until_ready(out_bf16)
    assert out_bf16.shape == (T, B, O)
    assert jnp.allclose(out_bf16, ref, atol=5e-2, rtol=5e-2), "bf16 mismatch vs reference"

    print("KERNEL_OK")
</pallas_src>

<mosaic_0001>
module attributes {stable_mosaic.version = 11 : i64} {
  func.func @lstm_chunk_kernel(%arg0: i32, %arg1: i32, %arg2: memref<4x8x128xf32, #tpu.memory_space<vmem>>, %arg3: memref<8x32xf32, #tpu.memory_space<vmem>>, %arg4: memref<8x32xf32, #tpu.memory_space<vmem>>, %arg5: memref<32x128xf32, #tpu.memory_space<vmem>>, %arg6: memref<4x8x32xf32, #tpu.memory_space<vmem>>, %arg7: memref<8x32xf32, #tpu.memory_space<vmem>>, %arg8: memref<8x32xf32, #tpu.memory_space<vmem>>) attributes {dimension_semantics = [#tpu.dimension_semantics<parallel>, #tpu.dimension_semantics<arbitrary>], iteration_bounds = array<i64: 2, 2>, scalar_prefetch = 0 : i64, scratch_operands = 2 : i64, tpu.core_type = #tpu.core_type<tc>, window_params = [{transform_indices = @transform_0, window_bounds = array<i64: 4, 8, 128>}, {transform_indices = @transform_1, window_bounds = array<i64: 8, 32>}, {transform_indices = @transform_2, window_bounds = array<i64: 8, 32>}, {pipeline_mode = #tpu.pipeline_mode<synchronous>, transform_indices = @transform_3, window_bounds = array<i64: 32, 128>}, {transform_indices = @transform_4, window_bounds = array<i64: 4, 8, 32>}]} {
    %c0_i32 = arith.constant 0 : i32
    %0 = arith.cmpi eq, %arg1, %c0_i32 : i32
    %1 = arith.extui %0 : i1 to i32
    %c0_i32_0 = arith.constant 0 : i32
    %2 = arith.cmpi ne, %1, %c0_i32_0 : i32
    scf.if %2 {
      %c0_38 = arith.constant 0 : index
      %c0_39 = arith.constant 0 : index
      %128 = vector.load %arg3[%c0_38, %c0_39] : memref<8x32xf32, #tpu.memory_space<vmem>>, vector<8x32xf32>
      %c0_40 = arith.constant 0 : index
      %c0_41 = arith.constant 0 : index
      %129 = vector.load %arg7[%c0_40, %c0_41] : memref<8x32xf32, #tpu.memory_space<vmem>>, vector<8x32xf32>
      tpu.vector_store %arg7[%c0_40, %c0_41], %128 {strides = array<i32>} : memref<8x32xf32, #tpu.memory_space<vmem>>, vector<8x32xf32>,
      %c0_42 = arith.constant 0 : index
      %c0_43 = arith.constant 0 : index
      %130 = vector.load %arg4[%c0_42, %c0_43] : memref<8x32xf32, #tpu.memory_space<vmem>>, vector<8x32xf32>
      %c0_44 = arith.constant 0 : index
      %c0_45 = arith.constant 0 : index
      %131 = vector.load %arg8[%c0_44, %c0_45] : memref<8x32xf32, #tpu.memory_space<vmem>>, vector<8x32xf32>
      tpu.vector_store %arg8[%c0_44, %c0_45], %130 {strides = array<i32>} : memref<8x32xf32, #tpu.memory_space<vmem>>, vector<8x32xf32>,
    } else {
    }
    %c0 = arith.constant 0 : index
    %c0_1 = arith.constant 0 : index
    %3 = vector.load %arg5[%c0, %c0_1] : memref<32x128xf32, #tpu.memory_space<vmem>>, vector<32x128xf32>
    %c0_2 = arith.constant 0 : index
    %c0_3 = arith.constant 0 : index
    %4 = vector.load %arg7[%c0_2, %c0_3] : memref<8x32xf32, #tpu.memory_space<vmem>>, vector<8x32xf32>
    %c0_4 = arith.constant 0 : index
    %c0_5 = arith.constant 0 : index
    %5 = vector.load %arg8[%c0_4, %c0_5] : memref<8x32xf32, #tpu.memory_space<vmem>>, vector<8x32xf32>
    %c0_i32_6 = arith.constant 0 : i32
    %6 = arith.index_cast %c0_i32_6 : i32 to index
    %c0_7 = arith.constant 0 : index
    %c0_8 = arith.constant 0 : index
    %7 = vector.load %arg2[%6, %c0_7, %c0_8] : memref<4x8x128xf32, #tpu.memory_space<vmem>>, vector<1x8x128xf32>
    %8 = vector.shape_cast %7 : vector<1x8x128xf32> to vector<8x128xf32>
    %cst = arith.constant dense<0.000000e+00> : vector<8x128xf32>
    %9 = tpu.matmul %4, %3, %cst {dimension_numbers = #tpu.dot_dimension_numbers<[1], [0], [0], [1], [0, 0, 1, 1], [], []>} : vector<8x32xf32>, vector<32x128xf32>, vector<8x128xf32> -> vector<8x128xf32>
    %10 = arith.addf %8, %9 : vector<8x128xf32>
    %11 = vector.extract_strided_slice %10 {offsets = [0, 0], sizes = [8, 64], strides = [1, 1]} : vector<8x128xf32> to vector<8x64xf32>
    %12 = arith.negf %11 : vector<8x64xf32>
    %13 = math.exp %12 : vector<8x64xf32>
    %cst_9 = arith.constant 1.000000e+00 : f32
    %14 = vector.broadcast %cst_9 : f32 to vector<8x64xf32>
    %15 = arith.addf %14, %13 : vector<8x64xf32>
    %16 = arith.divf %14, %15 : vector<8x64xf32>
    %17 = vector.extract_strided_slice %10 {offsets = [0, 64], sizes = [8, 32], strides = [1, 1]} : vector<8x128xf32> to vector<8x32xf32>
    %18 = math.tanh %17 : vector<8x32xf32>
    %19 = vector.extract_strided_slice %10 {offsets = [0, 96], sizes = [8, 32], strides = [1, 1]} : vector<8x128xf32> to vector<8x32xf32>
    %20 = arith.negf %19 : vector<8x32xf32>
    %21 = math.exp %20 : vector<8x32xf32>
    %cst_10 = arith.constant 1.000000e+00 : f32
    %22 = vector.broadcast %cst_10 : f32 to vector<8x32xf32>
    %23 = arith.addf %22, %21 : vector<8x32xf32>
    %24 = arith.divf %22, %23 : vector<8x32xf32>
    %25 = vector.extract_strided_slice %16 {offsets = [0, 32], sizes = [8, 32], strides = [1, 1]} : vector<8x64xf32> to vector<8x32xf32>
    %26 = arith.mulf %25, %5 : vector<8x32xf32>
    %27 = vector.extract_strided_slice %16 {offsets = [0, 0], sizes = [8, 32], strides = [1, 1]} : vector<8x64xf32> to vector<8x32xf32>
    %28 = arith.mulf %27, %18 : vector<8x32xf32>
    %29 = arith.addf %26, %28 : vector<8x32xf32>
    %30 = math.tanh %29 : vector<8x32xf32>
    %31 = arith.mulf %24, %30 : vector<8x32xf32>
    %32 = arith.index_cast %c0_i32_6 : i32 to index
    %c0_11 = arith.constant 0 : index
    %c0_12 = arith.constant 0 : index
    %33 = vector.load %arg6[%32, %c0_11, %c0_12] : memref<4x8x32xf32, #tpu.memory_space<vmem>>, vector<1x8x32xf32>
    %34 = vector.shape_cast %33 : vector<1x8x32xf32> to vector<8x32xf32>
    %35 = vector.shape_cast %31 : vector<8x32xf32> to vector<1x8x32xf32>
    tpu.vector_store %arg6[%32, %c0_11, %c0_12], %35 {strides = array<i32>} : memref<4x8x32xf32, #tpu.memory_space<vmem>>, vector<1x8x32xf32>,
    %c1_i32 = arith.constant 1 : i32
    %36 = arith.index_cast %c1_i32 : i32 to index
    %c0_13 = arith.constant 0 : index
    %c0_14 = arith.constant 0 : index
    %37 = vector.load %arg2[%36, %c0_13, %c0_14] : memref<4x8x128xf32, #tpu.memory_space<vmem>>, vector<1x8x128xf32>
    %38 = vector.shape_cast %37 : vector<1x8x128xf32> to vector<8x128xf32>
    %cst_15 = arith.constant dense<0.000000e+00> : vector<8x128xf32>
    %39 = tpu.matmul %31, %3, %cst_15 {dimension_numbers = #tpu.dot_dimension_numbers<[1], [0], [0], [1], [0, 0, 1, 1], [], []>} : vector<8x32xf32>, vector<32x128xf32>, vector<8x128xf32> -> vector<8x128xf32>
    %40 = arith.addf %38, %39 : vector<8x128xf32>
    %41 = vector.extract_strided_slice %40 {offsets = [0, 0], sizes = [8, 64], strides = [1, 1]} : vector<8x128xf32> to vector<8x64xf32>
    %42 = arith.negf %41 : vector<8x64xf32>
    %43 = math.exp %42 : vector<8x64xf32>
    %cst_16 = arith.constant 1.000000e+00 : f32
    %44 = vector.broadcast %cst_16 : f32 to vector<8x64xf32>
    %45 = arith.addf %44, %43 : vector<8x64xf32>
    %46 = arith.divf %44, %45 : vector<8x64xf32>
    %47 = vector.extract_strided_slice %40 {offsets = [0, 64], sizes = [8, 32], strides = [1, 1]} : vector<8x128xf32> to vector<8x32xf32>
    %48 = math.tanh %47 : vector<8x32xf32>
    %49 = vector.extract_strided_slice %40 {offsets = [0, 96], sizes = [8, 32], strides = [1, 1]} : vector<8x128xf32> to vector<8x32xf32>
    %50 = arith.negf %49 : vector<8x32xf32>
    %51 = math.exp %50 : vector<8x32xf32>
    %cst_17 = arith.constant 1.000000e+00 : f32
    %52 = vector.broadcast %cst_17 : f32 to vector<8x32xf32>
    %53 = arith.addf %52, %51 : vector<8x32xf32>
    %54 = arith.divf %52, %53 : vector<8x32xf32>
    %55 = vector.extract_strided_slice %46 {offsets = [0, 32], sizes = [8, 32], strides = [1, 1]} : vector<8x64xf32> to vector<8x32xf32>
    %56 = arith.mulf %55, %29 : vector<8x32xf32>
    %57 = vector.extract_strided_slice %46 {offsets = [0, 0], sizes = [8, 32], strides = [1, 1]} : vector<8x64xf32> to vector<8x32xf32>
    %58 = arith.mulf %57, %48 : vector<8x32xf32>
    %59 = arith.addf %56, %58 : vector<8x32xf32>
    %60 = math.tanh %59 : vector<8x32xf32>
    %61 = arith.mulf %54, %60 : vector<8x32xf32>
    %62 = arith.index_cast %c1_i32 : i32 to index
    %c0_18 = arith.constant 0 : index
    %c0_19 = arith.constant 0 : index
    %63 = vector.load %arg6[%62, %c0_18, %c0_19] : memref<4x8x32xf32, #tpu.memory_space<vmem>>, vector<1x8x32xf32>
    %64 = vector.shape_cast %63 : vector<1x8x32xf32> to vector<8x32xf32>
    %65 = vector.shape_cast %61 : vector<8x32xf32> to vector<1x8x32xf32>
    tpu.vector_store %arg6[%62, %c0_18, %c0_19], %65 {strides = array<i32>} : memref<4x8x32xf32, #tpu.memory_space<vmem>>, vector<1x8x32xf32>,
    %c2_i32 = arith.constant 2 : i32
    %66 = arith.index_cast %c2_i32 : i32 to index
    %c0_20 = arith.constant 0 : index
    %c0_21 = arith.constant 0 : index
    %67 = vector.load %arg2[%66, %c0_20, %c0_21] : memref<4x8x128xf32, #tpu.memory_space<vmem>>, vector<1x8x128xf32>
    %68 = vector.shape_cast %67 : vector<1x8x128xf32> to vector<8x128xf32>
    %cst_22 = arith.constant dense<0.000000e+00> : vector<8x128xf32>
    %69 = tpu.matmul %61, %3, %cst_22 {dimension_numbers = #tpu.dot_dimension_numbers<[1], [0], [0], [1], [0, 0, 1, 1], [], []>} : vector<8x32xf32>, vector<32x128xf32>, vector<8x128xf32> -> vector<8x128xf32>
    %70 = arith.addf %68, %69 : vector<8x128xf32>
    %71 = vector.extract_strided_slice %70 {offsets = [0, 0], sizes = [8, 64], strides = [1, 1]} : vector<8x128xf32> to vector<8x64xf32>
    %72 = arith.negf %71 : vector<8x64xf32>
    %73 = math.exp %72 : vector<8x64xf32>
    %cst_23 = arith.constant 1.000000e+00 : f32
    %74 = vector.broadcast %cst_23 : f32 to vector<8x64xf32>
    %75 = arith.addf %74, %73 : vector<8x64xf32>
    %76 = arith.divf %74, %75 : vector<8x64xf32>
    %77 = vector.extract_strided_slice %70 {offsets = [0, 64], sizes = [8, 32], strides = [1, 1]} : vector<8x128xf32> to vector<8x32xf32>
    %78 = math.tanh %77 : vector<8x32xf32>
    %79 = vector.extract_strided_slice %70 {offsets = [0, 96], sizes = [8, 32], strides = [1, 1]} : vector<8x128xf32> to vector<8x32xf32>
    %80 = arith.negf %79 : vector<8x32xf32>
    %81 = math.exp %80 : vector<8x32xf32>
    %cst_24 = arith.constant 1.000000e+00 : f32
    %82 = vector.broadcast %cst_24 : f32 to vector<8x32xf32>
    %83 = arith.addf %82, %81 : vector<8x32xf32>
    %84 = arith.divf %82, %83 : vector<8x32xf32>
    %85 = vector.extract_strided_slice %76 {offsets = [0, 32], sizes = [8, 32], strides = [1, 1]} : vector<8x64xf32> to vector<8x32xf32>
    %86 = arith.mulf %85, %59 : vector<8x32xf32>
    %87 = vector.extract_strided_slice %76 {offsets = [0, 0], sizes = [8, 32], strides = [1, 1]} : vector<8x64xf32> to vector<8x32xf32>
    %88 = arith.mulf %87, %78 : vector<8x32xf32>
    %89 = arith.addf %86, %88 : vector<8x32xf32>
    %90 = math.tanh %89 : vector<8x32xf32>
    %91 = arith.mulf %84, %90 : vector<8x32xf32>
    %92 = arith.index_cast %c2_i32 : i32 to index
    %c0_25 = arith.constant 0 : index
    %c0_26 = arith.constant 0 : index
    %93 = vector.load %arg6[%92, %c0_25, %c0_26] : memref<4x8x32xf32, #tpu.memory_space<vmem>>, vector<1x8x32xf32>
    %94 = vector.shape_cast %93 : vector<1x8x32xf32> to vector<8x32xf32>
    %95 = vector.shape_cast %91 : vector<8x32xf32> to vector<1x8x32xf32>
    tpu.vector_store %arg6[%92, %c0_25, %c0_26], %95 {strides = array<i32>} : memref<4x8x32xf32, #tpu.memory_space<vmem>>, vector<1x8x32xf32>,
    %c3_i32 = arith.constant 3 : i32
    %96 = arith.index_cast %c3_i32 : i32 to index
    %c0_27 = arith.constant 0 : index
    %c0_28 = arith.constant 0 : index
    %97 = vector.load %arg2[%96, %c0_27, %c0_28] : memref<4x8x128xf32, #tpu.memory_space<vmem>>, vector<1x8x128xf32>
    %98 = vector.shape_cast %97 : vector<1x8x128xf32> to vector<8x128xf32>
    %cst_29 = arith.constant dense<0.000000e+00> : vector<8x128xf32>
    %99 = tpu.matmul %91, %3, %cst_29 {dimension_numbers = #tpu.dot_dimension_numbers<[1], [0], [0], [1], [0, 0, 1, 1], [], []>} : vector<8x32xf32>, vector<32x128xf32>, vector<8x128xf32> -> vector<8x128xf32>
    %100 = arith.addf %98, %99 : vector<8x128xf32>
    %101 = vector.extract_strided_slice %100 {offsets = [0, 0], sizes = [8, 64], strides = [1, 1]} : vector<8x128xf32> to vector<8x64xf32>
    %102 = arith.negf %101 : vector<8x64xf32>
    %103 = math.exp %102 : vector<8x64xf32>
    %cst_30 = arith.constant 1.000000e+00 : f32
    %104 = vector.broadcast %cst_30 : f32 to vector<8x64xf32>
    %105 = arith.addf %104, %103 : vector<8x64xf32>
    %106 = arith.divf %104, %105 : vector<8x64xf32>
    %107 = vector.extract_strided_slice %100 {offsets = [0, 64], sizes = [8, 32], strides = [1, 1]} : vector<8x128xf32> to vector<8x32xf32>
    %108 = math.tanh %107 : vector<8x32xf32>
    %109 = vector.extract_strided_slice %100 {offsets = [0, 96], sizes = [8, 32], strides = [1, 1]} : vector<8x128xf32> to vector<8x32xf32>
    %110 = arith.negf %109 : vector<8x32xf32>
    %111 = math.exp %110 : vector<8x32xf32>
    %cst_31 = arith.constant 1.000000e+00 : f32
    %112 = vector.broadcast %cst_31 : f32 to vector<8x32xf32>
    %113 = arith.addf %112, %111 : vector<8x32xf32>
    %114 = arith.divf %112, %113 : vector<8x32xf32>
    %115 = vector.extract_strided_slice %106 {offsets = [0, 32], sizes = [8, 32], strides = [1, 1]} : vector<8x64xf32> to vector<8x32xf32>
    %116 = arith.mulf %115, %89 : vector<8x32xf32>
    %117 = vector.extract_strided_slice %106 {offsets = [0, 0], sizes = [8, 32], strides = [1, 1]} : vector<8x64xf32> to vector<8x32xf32>
    %118 = arith.mulf %117, %108 : vector<8x32xf32>
    %119 = arith.addf %116, %118 : vector<8x32xf32>
    %120 = math.tanh %119 : vector<8x32xf32>
    %121 = arith.mulf %114, %120 : vector<8x32xf32>
    %122 = arith.index_cast %c3_i32 : i32 to index
    %c0_32 = arith.constant 0 : index
    %c0_33 = arith.constant 0 : index
    %123 = vector.load %arg6[%122, %c0_32, %c0_33] : memref<4x8x32xf32, #tpu.memory_space<vmem>>, vector<1x8x32xf32>
    %124 = vector.shape_cast %123 : vector<1x8x32xf32> to vector<8x32xf32>
    %125 = vector.shape_cast %121 : vector<8x32xf32> to vector<1x8x32xf32>
    tpu.vector_store %arg6[%122, %c0_32, %c0_33], %125 {strides = array<i32>} : memref<4x8x32xf32, #tpu.memory_space<vmem>>, vector<1x8x32xf32>,
    %c4_i32 = arith.constant 4 : i32
    %c0_34 = arith.constant 0 : index
    %c0_35 = arith.constant 0 : index
    %126 = vector.load %arg7[%c0_34, %c0_35] : memref<8x32xf32, #tpu.memory_space<vmem>>, vector<8x32xf32>
    tpu.vector_store %arg7[%c0_34, %c0_35], %121 {strides = array<i32>} : memref<8x32xf32, #tpu.memory_space<vmem>>, vector<8x32xf32>,
    %c0_36 = arith.constant 0 : index
    %c0_37 = arith.constant 0 : index
    %127 = vector.load %arg8[%c0_36, %c0_37] : memref<8x32xf32, #tpu.memory_space<vmem>>, vector<8x32xf32>
    tpu.vector_store %arg8[%c0_36, %c0_37], %119 {strides = array<i32>} : memref<8x32xf32, #tpu.memory_space<vmem>>, vector<8x32xf32>,
    return
  }
  func.func @transform_0(%arg0: i32, %arg1: i32) -> (i32, i32, i32) {
    %c0_i32 = arith.constant 0 : i32
    %c0_i32_0 = arith.constant 0 : i32
    return %arg1, %arg0, %c0_i32 : i32, i32, i32
  }
  func.func @transform_1(%arg0: i32, %arg1: i32) -> (i32, i32) {
    %c0_i32 = arith.constant 0 : i32
    %c0_i32_0 = arith.constant 0 : i32
    return %arg0, %c0_i32 : i32, i32
  }
  func.func @transform_2(%arg0: i32, %arg1: i32) -> (i32, i32) {
    %c0_i32 = arith.constant 0 : i32
    %c0_i32_0 = arith.constant 0 : i32
    return %arg0, %c0_i32 : i32, i32
  }
  func.func @transform_3(%arg0: i32, %arg1: i32) -> (i32, i32) {
    %c0_i32 = arith.constant 0 : i32
    %c0_i32_0 = arith.constant 0 : i32
    %c0_i32_1 = arith.constant 0 : i32
    return %c0_i32, %c0_i32_0 : i32, i32
  }
  func.func @transform_4(%arg0: i32, %arg1: i32) -> (i32, i32, i32) {
    %c0_i32 = arith.constant 0 : i32
    %c0_i32_0 = arith.constant 0 : i32
    return %arg1, %arg0, %c0_i32 : i32, i32, i32
  }
}

</mosaic_0001>

<llo_original>
// kernel: lstm_seq2seq_same.1
$region0: #{lstm_seq2seq_same.1}
  #allocation0 [shape = 'u32[]', space=smem, size = 0x4, offset = 0x4, fixed_abs, tag = 'smem constant byte address 0x4 - core index']
  #allocation1 [shape = 'u32[144,128]{1,0:T(1,128)}', space=vmem, size = 0x12000, scoped, tag = 'internal scratch']
  #allocation2 [shape = 'f32[8,32]{1,0:T(8,128)}', space=vmem, size = 0x1000, scoped, tag = 'scratch operand']
  #allocation3 [shape = 'f32[8,32]{1,0:T(8,128)}', space=vmem, size = 0x1000, scoped, tag = 'scratch operand']
  %s0 = inlined_call_operand.vmem [shape: f32[8,16,128], index: 0, kind: input, shape index: {}]
  %s1 = inlined_call_operand.vmem [shape: f32[16,32], index: 1, kind: input, shape index: {}]
  %s2 = inlined_call_operand.vmem [shape: f32[16,32], index: 2, kind: input, shape index: {}]
  %s3 = inlined_call_operand.vmem [shape: f32[32,128], index: 3, kind: input, shape index: {}]
  %s4 = inlined_call_operand.vmem [shape: f32[8,16,32], index: 4, kind: output, shape index: {}]
  %s5 = sld [smem:[#allocation0]]
  $region125: #{lstm_seq2seq_same.1} parent=0
    _
  %s7 = ssub.s32 1, %s5
  %s8 = scalar_select 0, %s7, %s5
  $region1: #{lstm_seq2seq_same.1} parent=0
    #allocation4 [shape = 'u8[32768]{0}', space=vmem, size = 0x8000, scoped, tag = 'input window, operand 0']
    #allocation5 [shape = 'u8[32768]{0}', space=vmem, size = 0x8000, scoped, tag = 'output window, operand 0']
    loop: start=0, step=1, limit=6
    $region2: #{lstm_seq2seq_same.1} parent=1 // loop_pre_header
      _
    $region3: #{lstm_seq2seq_same.1} parent=1 // loop_header
      %s10 = sphi 0, %s14
      %p11 = scmp.ge.s32.totalorder %s10, 6
      %s17 = sphi 0, %s29
      %s18 = sphi 0, %s25
      %s19 = sphi 0, %s17
      %s20 = sphi 0, %s18
      %s21 = sphi 0, %s19
      %s22 = sphi 0, %s20
      %s34 = sphi 0, %s36
      %s37 = sphi 0, %s34
      %s38 = sphi 0, %s37
      %s54 = sphi 0, %s38
      %s60 = sphi 0, %s62
      %s63 = sphi 0, %s60
      %s64 = sphi 0, %s63
      %s80 = sphi 0, %s64
      %s86 = sphi 0, %s88
      %s89 = sphi 0, %s86
      %s90 = sphi 0, %s89
      %s106 = sphi 0, %s90
      %s110 = sphi 0, %s110
      %s112 = sphi 0, %s110
      %s113 = sphi 0, %s112
      %s127 = sphi 0, %s113
      %s135 = sphi 0, %s137
      %s138 = sphi 0, %s135
      %s139 = sphi 0, %s138
      %s155 = sphi 0, %s139
    $region4: #{lstm_seq2seq_same.1} parent=1 // loop_header_branch
      %13 = sbr.rel (%p11) target = $region8
    $region5: #{lstm_seq2seq_same.1} parent=1 // loop_body
      %s15 = ssub.s32 %s10, 1
      %s16 = ssub.s32 %s10, 2
      %s23 = sadd.s32 1, %s18
      %p24 = scmp.ge.s32.totalorder %s23, 2
      %s25 = scalar_select %p24, 0, %s23
      %s26 = sadd.s32 1, %s17
      %s27 = scalar_select %p24, %s26, %s17
      %p28 = scmp.ge.s32.totalorder %s27, 2
      %s29 = scalar_select %p28, 0, %s27
      %s30 = ssub.s32 %s18, %s25
      %s31 = ssub.s32 %s17, %s29
      %s32 = sor.u32 %s30, %s31
      %p33 = scmp.eq.s32.totalorder %s32, 0
      %s35 = sadd.s32 %s34, 1
      %s36 = scalar_select %p33, %s34, %s35
      %p39 = pneg %p33
      %p40 = scmp.eq.s32.totalorder %s10, 3
      %p41 = por %p39, %p40
      %p42 = scmp.ne.s32.totalorder %s34, %s37
      %p43 = scmp.eq.s32.totalorder %s10, 0
      %p44 = por %p42, %p43
      %p45 = scmp.ne.s32.totalorder %s34, %s37
      %p46 = scmp.eq.s32.totalorder %s15, 3
      %p47 = por %p45, %p46
      %p48 = scmp.ne.s32.totalorder %s37, %s38
      %p49 = scmp.eq.s32.totalorder %s15, 0
      %p50 = por %p48, %p49
      %p51 = scmp.ne.s32.totalorder %s37, %s38
      %p52 = scmp.eq.s32.totalorder %s16, 3
      %p53 = por %p51, %p52
      %p55 = scmp.ne.s32.totalorder %s38, %s54
      %p56 = scmp.eq.s32.totalorder %s16, 0
      %p57 = por %p55, %p56
      %s58 = ssub.s32 %s17, %s29
      %p59 = scmp.eq.s32.totalorder %s58, 0
      %s61 = sadd.s32 %s60, 1
      %s62 = scalar_select %p59, %s60, %s61
      %p65 = pneg %p59
      %p66 = scmp.eq.s32.totalorder %s10, 3
      %p67 = por %p65, %p66
      %p68 = scmp.ne.s32.totalorder %s60, %s63
      %p69 = scmp.eq.s32.totalorder %s10, 0
      %p70 = por %p68, %p69
      %p71 = scmp.ne.s32.totalorder %s60, %s63
      %p72 = scmp.eq.s32.totalorder %s15, 3
      %p73 = por %p71, %p72
      %p74 = scmp.ne.s32.totalorder %s63, %s64
      %p75 = scmp.eq.s32.totalorder %s15, 0
      %p76 = por %p74, %p75
      %p77 = scmp.ne.s32.totalorder %s63, %s64
      %p78 = scmp.eq.s32.totalorder %s16, 3
      %p79 = por %p77, %p78
      %p81 = scmp.ne.s32.totalorder %s64, %s80
      %p82 = scmp.eq.s32.totalorder %s16, 0
      %p83 = por %p81, %p82
      %s84 = ssub.s32 %s17, %s29
      %p85 = scmp.eq.s32.totalorder %s84, 0
      %s87 = sadd.s32 %s86, 1
      %s88 = scalar_select %p85, %s86, %s87
      %p91 = pneg %p85
      %p92 = scmp.eq.s32.totalorder %s10, 3
      %p93 = por %p91, %p92
      %p94 = scmp.ne.s32.totalorder %s86, %s89
      %p95 = scmp.eq.s32.totalorder %s10, 0
      %p96 = por %p94, %p95
      %p97 = scmp.ne.s32.totalorder %s86, %s89
      %p98 = scmp.eq.s32.totalorder %s15, 3
      %p99 = por %p97, %p98
      %p100 = scmp.ne.s32.totalorder %s89, %s90
      %p101 = scmp.eq.s32.totalorder %s15, 0
      %p102 = por %p100, %p101
      %p103 = scmp.ne.s32.totalorder %s89, %s90
      %p104 = scmp.eq.s32.totalorder %s16, 3
      %p105 = por %p103, %p104
      %p107 = scmp.ne.s32.totalorder %s90, %s106
      %p108 = scmp.eq.s32.totalorder %s16, 0
      %p109 = por %p107, %p108
      %s111 = sadd.s32 %s110, 1
      %p114 = scmp.eq.s32.totalorder %s10, 3
      %p115 = scmp.ne.s32.totalorder %s110, %s112
      %p116 = scmp.eq.s32.totalorder %s10, 0
      %p117 = por %p115, %p116
      %p118 = scmp.ne.s32.totalorder %s110, %s112
      %p119 = scmp.eq.s32.totalorder %s15, 3
      %p120 = por %p118, %p119
      %p121 = scmp.ne.s32.totalorder %s112, %s113
      %p122 = scmp.eq.s32.totalorder %s15, 0
      %p123 = por %p121, %p122
      %p124 = scmp.ne.s32.totalorder %s112, %s113
      %p125 = scmp.eq.s32.totalorder %s16, 3
      %p126 = por %p124, %p125
      %p128 = scmp.ne.s32.totalorder %s113, %s127
      %p129 = scmp.eq.s32.totalorder %s16, 0
      %p130 = por %p128, %p129
      %s131 = ssub.s32 %s18, %s25
      %s132 = ssub.s32 %s17, %s29
      %s133 = sor.u32 %s131, %s132
      %p134 = scmp.eq.s32.totalorder %s133, 0
      %s136 = sadd.s32 %s135, 1
      %s137 = scalar_select %p134, %s135, %s136
      %p140 = pneg %p134
      %p141 = scmp.eq.s32.totalorder %s10, 3
      %p142 = por %p140, %p141
      %p143 = scmp.ne.s32.totalorder %s135, %s138
      %p144 = scmp.eq.s32.totalorder %s10, 0
      %p145 = por %p143, %p144
      %p146 = scmp.ne.s32.totalorder %s135, %s138
      %p147 = scmp.eq.s32.totalorder %s15, 3
      %p148 = por %p146, %p147
      %p149 = scmp.ne.s32.totalorder %s138, %s139
      %p150 = scmp.eq.s32.totalorder %s15, 0
      %p151 = por %p149, %p150
      %p152 = scmp.ne.s32.totalorder %s138, %s139
      %p153 = scmp.eq.s32.totalorder %s16, 3
      %p154 = por %p152, %p153
      %p156 = scmp.ne.s32.totalorder %s139, %s155
      %p157 = scmp.eq.s32.totalorder %s16, 0
      %p158 = por %p156, %p157
      %p159 = scmp.le.s32.totalorder 1, %s10
      %p160 = scmp.lt.s32.totalorder %s10, 5
      %p161 = pnand %p159, %p160
      %p162 = pneg %p161
      // Predicated region
      $region9: #{lstm_seq2seq_same.1} parent=5 // pred_check
        _
      $region10: #{lstm_seq2seq_same.1} parent=5 // pred_check_branch
        %164 = sbr.rel (%p161) target = $region12
      $region11: #{lstm_seq2seq_same.1} parent=5 // pred_region
        %s165 = ssub.s32 %s10, 1
        // Predicated region
        $region13: #{lstm_seq2seq_same.1} parent=11 // pred_check
          %p166 = pneg %p123
        $region14: #{lstm_seq2seq_same.1} parent=11 // pred_check_branch
          %168 = sbr.rel (%p166) target = $region16
        $region15: #{lstm_seq2seq_same.1} parent=11 // pred_region
          _
        $region16: #{lstm_seq2seq_same.1} parent=11 // pred_fallthru
          _
      $region12: #{lstm_seq2seq_same.1} parent=5 // pred_fallthru
        _
      %p169 = scmp.lt.s32.totalorder %s10, 4
      // Predicated region
      $region17: #{lstm_seq2seq_same.1} parent=5 // pred_check
        %p170 = pneg %p169
      $region18: #{lstm_seq2seq_same.1} parent=5 // pred_check_branch
        %172 = sbr.rel (%p170) target = $region20
      $region19: #{lstm_seq2seq_same.1} parent=5 // pred_region
        // Predicated region
        $region21: #{lstm_seq2seq_same.1} parent=19 // pred_check
          %p173 = pneg %p44
        $region22: #{lstm_seq2seq_same.1} parent=19 // pred_check_branch
          %175 = sbr.rel (%p173) target = $region24
        $region23: #{lstm_seq2seq_same.1} parent=19 // pred_region
          %s176 = sand.u32 %s34, 1
          %s177 = sand.u32 %s34, 1
          %s178 = smul.addr %s177, 32
          %s179 = scalar_lea.vmem [#allocation4], %s178
          %s180 = smul.u32 4, %s18
          %s181 = smul.addr %s180, 2
          %s182 = sadd.s32 %s17, %s181
          %s183 = smul.addr %s182, 8
          %s184 = scalar_lea.vmem %s0, %s183
          // Predicated region
          $region25: #{lstm_seq2seq_same.1} parent=23 // pred_check
            _
          $region26: #{lstm_seq2seq_same.1} parent=23 // pred_check_branch
            %186 = sbr.rel (0) target = $region28
          $region27: #{lstm_seq2seq_same.1} parent=23 // pred_region
            // Predicated region
            $region29: #{lstm_seq2seq_same.1} parent=27 // pred_check
              _
            $region30: #{lstm_seq2seq_same.1} parent=27 // pred_check_branch
              %188 = sbr.rel (0) target = $region32
            $region31: #{lstm_seq2seq_same.1} parent=27 // pred_region
              // Predicated region
              $region44: #{lstm_seq2seq_same.1} parent=31 // pred_check
                _
              $region45: #{lstm_seq2seq_same.1} parent=31 // pred_check_branch
                %210 = sbr.rel (0) target = $region47
              $region46: #{lstm_seq2seq_same.1} parent=31 // pred_region
                loop: start=0, step=1, limit=1
                $region48: #{lstm_seq2seq_same.1} parent=46 // loop_pre_header
                  _
                $region49: #{lstm_seq2seq_same.1} parent=46 // loop_header
                  %s212 = sphi 0, %s216
                  %p213 = scmp.ge.s32.totalorder %s212, 1
                  %s217 = sphi %s184, %s184
                  %s218 = sphi %s179, %s179
                $region50: #{lstm_seq2seq_same.1} parent=46 // loop_header_branch
                  %215 = sbr.rel (%p213) target = $region54
                $region51: #{lstm_seq2seq_same.1} parent=46 // loop_body
                  %v219 = vld [vmem:[%s217] sm:$0xff]
                  %220 = vst [vmem:[%s218] sm:$0xff] %v219
                  %v221 = vld [vmem:[%s217 + $0x10] sm:$0xff]
                  %222 = vst [vmem:[%s218 + $0x8] sm:$0xff] %v221
                  %v223 = vld [vmem:[%s217 + $0x20] sm:$0xff]
                  %224 = vst [vmem:[%s218 + $0x10] sm:$0xff] %v223
                  %v225 = vld [vmem:[%s217 + $0x30] sm:$0xff]
                  %226 = vst [vmem:[%s218 + $0x18] sm:$0xff] %v225
                $region52: #{lstm_seq2seq_same.1} parent=46 // loop_footer
                  %s216 = sadd.s32 1, %s212
                $region53: #{lstm_seq2seq_same.1} parent=46 // loop_footer_branch
                  %211 = sbr.rel target = $region49
                $region54: #{lstm_seq2seq_same.1} parent=46 // loop_exit
                  _
              $region47: #{lstm_seq2seq_same.1} parent=31 // pred_fallthru
                _
              // Predicated region
              $region55: #{lstm_seq2seq_same.1} parent=31 // pred_check
                _
              $region56: #{lstm_seq2seq_same.1} parent=31 // pred_check_branch
                %228 = sbr.rel target = $region58
              $region57: #{lstm_seq2seq_same.1} parent=31 // pred_region
                _
              $region58: #{lstm_seq2seq_same.1} parent=31 // pred_fallthru
                _
            $region32: #{lstm_seq2seq_same.1} parent=27 // pred_fallthru
              _
            // Predicated region
            $region33: #{lstm_seq2seq_same.1} parent=27 // pred_check
              _
            $region34: #{lstm_seq2seq_same.1} parent=27 // pred_check_branch
              %190 = sbr.rel target = $region36
            $region35: #{lstm_seq2seq_same.1} parent=27 // pred_region
              %s192 = ssub.s32 256, 1
              loop: start=0, step=1, limit=1
              $region37: #{lstm_seq2seq_same.1} parent=35 // loop_pre_header
                _
              $region38: #{lstm_seq2seq_same.1} parent=35 // loop_header
                %s194 = sphi 0, %s198
                %p195 = scmp.ge.s32.totalorder %s194, 1
                %s199 = sphi %s184, %s184
                %s200 = sphi %s179, %s179
              $region39: #{lstm_seq2seq_same.1} parent=35 // loop_header_branch
                %197 = sbr.rel (%p195) target = $region43
              $region40: #{lstm_seq2seq_same.1} parent=35 // loop_body
                %v201 = vld [vmem:[%s199] sm:%s192]
                %202 = vst [vmem:[%s200] sm:%s192] %v201
                %v203 = vld [vmem:[%s199 + $0x10] sm:%s192]
                %204 = vst [vmem:[%s200 + $0x8] sm:%s192] %v203
                %v205 = vld [vmem:[%s199 + $0x20] sm:%s192]
                %206 = vst [vmem:[%s200 + $0x10] sm:%s192] %v205
                %v207 = vld [vmem:[%s199 + $0x30] sm:%s192]
                %208 = vst [vmem:[%s200 + $0x18] sm:%s192] %v207
              $region41: #{lstm_seq2seq_same.1} parent=35 // loop_footer
                %s198 = sadd.s32 1, %s194
              $region42: #{lstm_seq2seq_same.1} parent=35 // loop_footer_branch
                %193 = sbr.rel target = $region38
              $region43: #{lstm_seq2seq_same.1} parent=35 // loop_exit
                _
            $region36: #{lstm_seq2seq_same.1} parent=27 // pred_fallthru
              _
          $region28: #{lstm_seq2seq_same.1} parent=23 // pred_fallthru
            _
          %229 = vnop
        $region24: #{lstm_seq2seq_same.1} parent=19 // pred_fallthru
          _
        // Predicated region
        $region59: #{lstm_seq2seq_same.1} parent=19 // pred_check
          %p230 = pneg %p70
        $region60: #{lstm_seq2seq_same.1} parent=19 // pred_check_branch
          %232 = sbr.rel (%p230) target = $region62
        $region61: #{lstm_seq2seq_same.1} parent=19 // pred_region
          %p233 = scmp.lt.s32.totalorder %s17, 1
          %s234 = scalar_select %p233, %s17, 1
          %s235 = smul.addr %s234, 8
          %s236 = scalar_lea.vmem %s1, %s235
        $region62: #{lstm_seq2seq_same.1} parent=19 // pred_fallthru
          _
        // Predicated region
        $region63: #{lstm_seq2seq_same.1} parent=19 // pred_check
          %p237 = pneg %p96
        $region64: #{lstm_seq2seq_same.1} parent=19 // pred_check_branch
          %239 = sbr.rel (%p237) target = $region66
        $region65: #{lstm_seq2seq_same.1} parent=19 // pred_region
          %p240 = scmp.lt.s32.totalorder %s17, 1
          %s241 = scalar_select %p240, %s17, 1
          %s242 = smul.addr %s241, 8
          %s243 = scalar_lea.vmem %s2, %s242
        $region66: #{lstm_seq2seq_same.1} parent=19 // pred_fallthru
          _
      $region20: #{lstm_seq2seq_same.1} parent=5 // pred_fallthru
        _
      %p244 = scmp.le.s32.totalorder 1, %s10
      %p245 = scmp.lt.s32.totalorder %s10, 5
      %p246 = pnand %p244, %p245
      %p247 = pneg %p246
      // Predicated region
      $region67: #{lstm_seq2seq_same.1} parent=5 // pred_check
        _
      $region68: #{lstm_seq2seq_same.1} parent=5 // pred_check_branch
        %249 = sbr.rel (%p246) target = $region70
      $region69: #{lstm_seq2seq_same.1} parent=5 // pred_region
        %s250 = ssub.s32 %s10, 1
        %s251 = sand.u32 %s37, 1
        %s252 = sand.u32 %s37, 1
        %s253 = smul.addr %s252, 32
        %s254 = scalar_lea.vmem [#allocation4], %s253
        // Predicated region
        $region71: #{lstm_seq2seq_same.1} parent=69 // pred_check
          %p255 = pneg %p50
        $region72: #{lstm_seq2seq_same.1} parent=69 // pred_check_branch
          %257 = sbr.rel (%p255) target = $region74
        $region73: #{lstm_seq2seq_same.1} parent=69 // pred_region
          _
        $region74: #{lstm_seq2seq_same.1} parent=69 // pred_fallthru
          _
        %s258 = sand.u32 %s37, 1
        %s259 = sand.u32 %s37, 1
        %s260 = smul.addr %s259, 32
        %s261 = scalar_lea.vmem [#allocation4], %s260
        %p262 = pneg %p50
        %p263 = pneg %p47
        %p264 = scmp.lt.s32.totalorder %s19, 1
        %s265 = scalar_select %p264, %s19, 1
        %s266 = smul.addr %s265, 8
        %s267 = scalar_lea.vmem %s1, %s266
        %p268 = pneg %p76
        %p269 = pneg %p73
        %p270 = scmp.lt.s32.totalorder %s19, 1
        %s271 = scalar_select %p270, %s19, 1
        %s272 = smul.addr %s271, 8
        %s273 = scalar_lea.vmem %s2, %s272
        %p274 = pneg %p102
        %p275 = pneg %p99
        %p276 = pneg %p123
        %p277 = pneg %p120
        %p278 = pneg %p151
        %p279 = pneg %p148
        %s280 = sand.u32 %s138, 1
        %s281 = sand.u32 %s138, 1
        %s282 = smul.addr %s281, 32
        %s283 = scalar_lea.vmem [#allocation5], %s282
        %s284 = smul.u32 4, %s20
        %p285 = scmp.lt.s32.totalorder %s19, 1
        %s286 = scalar_select %p285, %s19, 1
        %s287 = smul.addr %s286, 8
        %s288 = scalar_lea.vmem %s1, %s287
        %p289 = scmp.lt.s32.totalorder %s19, 1
        %s290 = scalar_select %p289, %s19, 1
        %s291 = smul.addr %s290, 8
        %s292 = scalar_lea.vmem %s2, %s291
        %s293 = smul.u32 4, %s20
        %p294 = scmp.eq.s32.totalorder %s20, 0
        // Predicated region
        $region75: #{lstm_seq2seq_same.1} parent=69 // pred_check
          %p295 = pneg %p294
        $region76: #{lstm_seq2seq_same.1} parent=69 // pred_check_branch
          %297 = sbr.rel (%p295) target = $region78
        $region77: #{lstm_seq2seq_same.1} parent=69 // pred_region
          %v298 = vld [vmem:[%s288] sm:$0xff]
          %vm299 = vcmask 261120
          %300 = vst.msk [vmem:[#allocation2] sm:$0xff] %vm299, %v298
          %v301 = vld [vmem:[%s292] sm:$0xff]
          %302 = vst.msk [vmem:[#allocation3] sm:$0xff] %vm299, %v301
        $region78: #{lstm_seq2seq_same.1} parent=69 // pred_fallthru
          _
        %v303 = vld [vmem:[%s3] sm:$0xff]
        %v304 = vld [vmem:[%s3 + $0x8] sm:$0xff]
        %v305 = vld [vmem:[%s3 + $0x10] sm:$0xff]
        %v306 = vld [vmem:[%s3 + $0x18] sm:$0xff]
        %v307 = vld [vmem:[#allocation2] sm:$0xff]
        %v308 = vld [vmem:[#allocation3] sm:$0xff]
        %v309 = vld [vmem:[%s254] sm:$0xff]
        %vm310 = vcmask 261120
        %v312 = vsel %vm310, %v307, 0
        %314 = vmatprep.subr.mxu0 0.0
        %315 = vmatpush1.msra.mxu0 0.0
        %316 = vmatprep.subr.mxu0 0.0
        %317 = vmatpush1.msra.mxu0 0.0
        %318 = vmatprep.subr.mxu0 0.0
        %319 = vmatpush1.msra.mxu0 0.0
        %320 = vmatprep.subr.mxu0 0.0
        %321 = vmatpush1.msra.mxu0 0.0
        %322 = vmatprep.subr.mxu0 0.0
        %323 = vmatpush1.msra.mxu0 0.0
        %324 = vmatprep.subr.mxu0 0.0
        %325 = vmatpush1.msra.mxu0 0.0
        %326 = vmatprep.subr.mxu0 0.0
        %327 = vmatpush1.msra.mxu0 0.0
        %328 = vmatprep.subr.mxu0 0.0
        %329 = vmatpush1.msra.mxu0 0.0
        %330 = vmatprep.subr.mxu0 0.0
        %331 = vmatpush1.msra.mxu0 0.0
        %332 = vmatprep.subr.mxu0 0.0
        %333 = vmatpush1.msra.mxu0 0.0
        %334 = vmatprep.subr.mxu0 0.0
        %335 = vmatpush1.msra.mxu0 0.0
        %336 = vmatprep.subr.mxu0 0.0
        %337 = vmatpush1.msra.mxu0 0.0
        %338 = vmatprep.subr.mxu0 0.0
        %339 = vmatpush1.msra.mxu0 %v306
        %340 = vmatprep.subr.mxu0 0.0
        %341 = vmatpush1.msra.mxu0 %v305
        %342 = vmatprep.subr.mxu0 0.0
        %343 = vmatpush1.msra.mxu0 %v304
        %344 = vmatprep.subr.mxu0 0.0
        %345 = vmatpush1.msra.mxu0 %v303
        %346 = vmatprep.subr.mxu0 0.0
        %347 = vmatpush2.msra.mxu0 0.0
        %348 = vmatprep.subr.mxu0 0.0
        %349 = vmatpush2.msra.mxu0 0.0
        %350 = vmatprep.subr.mxu0 0.0
        %351 = vmatpush2.msra.mxu0 0.0
        %352 = vmatprep.subr.mxu0 0.0
        %353 = vmatpush2.msra.mxu0 0.0
        %354 = vmatprep.subr.mxu0 0.0
        %355 = vmatpush2.msra.mxu0 0.0
        %356 = vmatprep.subr.mxu0 0.0
        %357 = vmatpush2.msra.mxu0 0.0
        %358 = vmatprep.subr.mxu0 0.0
        %359 = vmatpush2.msra.mxu0 0.0
        %360 = vmatprep.subr.mxu0 0.0
        %361 = vmatpush2.msra.mxu0 0.0
        %362 = vmatprep.subr.mxu0 0.0
        %363 = vmatpush2.msra.mxu0 0.0
        %364 = vmatprep.subr.mxu0 0.0
        %365 = vmatpush2.msra.mxu0 0.0
        %366 = vmatprep.subr.mxu0 0.0
        %367 = vmatpush2.msra.mxu0 0.0
        %368 = vmatprep.subr.mxu0 0.0
        %369 = vmatpush2.msra.mxu0 0.0
        %370 = vmatprep.subr.mxu0 0.0
        %371 = vmatpush2.msra.mxu0 0.0
        %372 = vmatprep.subr.mxu0 0.0
        %373 = vmatpush2.msra.mxu0 0.0
        %374 = vmatprep.subr.mxu0 0.0
        %375 = vmatpush2.msra.mxu0 0.0
        %376 = vmatprep.subr.mxu0 0.0
        %377 = vmatpush2.msra.mxu0 0.0
        %378 = vmatprep.mubr.f32.mxu0 0.0
        %379 = vmatmul.mubr.f32.gmra.mxu0 %v312
        %v380 = vpop.f32.mrf.mxu0
        %v381 = vadd.f32 0.0, %v380
        %v382 = vpop.f32.mrf.mxu0
        %383 = vdwg.mxu0
        %v384 = vadd.f32 %v309, %v381
        %v385 = vxor.u32 %v384, 2147483648
        %v386 = vmul.f32 %v385, 1.442695
        %v387 = vpow.pop %v386
        %v388 = vadd.f32 %v387, 1.0
        %v389 = vrcp.pop %v388
        %v390 = vmul.f32 1.0, %v389
        %v391 = vtanh.pop %v384
        %393 = vrot.lane.b32.xlu0 %v308, 32
        %v394 = vpop.permute.xlu0 %393
        %v396 = vmul.f32 %v390, %v394
        %398 = vrot.lane.b32.xlu0 %v391, 64
        %v399 = vpop.permute.xlu0 %398
        %v401 = vmul.f32 %v390, %v399
        %403 = vrot.lane.b32.xlu0 %v401, 32
        %v404 = vpop.permute.xlu0 %403
        %v406 = vadd.f32 %v396, %v404
        %v407 = vtanh.pop %v406
        %409 = vrot.lane.b32.xlu0 %v407, 64
        %v410 = vpop.permute.xlu0 %409
        %v412 = vmul.f32 %v390, %v410
        %414 = vrot.lane.b32.xlu0 %v412, 32
        %v415 = vpop.permute.xlu0 %414
        %417 = vst.msk [vmem:[%s283] sm:$0xff] %vm310, %v415
        %s418 = scalar_lea.vmem %s254, 8 [#allocation4]
        %v419 = vld [vmem:[%s418] sm:$0xff]
        %v420 = vsel %vm310, %v415, 0
        %422 = vmatprep.subr.mxu0 0.0
        %423 = vmatpush1.msra.mxu0 0.0
        %424 = vmatprep.subr.mxu0 0.0
        %425 = vmatpush1.msra.mxu0 0.0
        %426 = vmatprep.subr.mxu0 0.0
        %427 = vmatpush1.msra.mxu0 0.0
        %428 = vmatprep.subr.mxu0 0.0
        %429 = vmatpush1.msra.mxu0 0.0
        %430 = vmatprep.subr.mxu0 0.0
        %431 = vmatpush1.msra.mxu0 0.0
        %432 = vmatprep.subr.mxu0 0.0
        %433 = vmatpush1.msra.mxu0 0.0
        %434 = vmatprep.subr.mxu0 0.0
        %435 = vmatpush1.msra.mxu0 0.0
        %436 = vmatprep.subr.mxu0 0.0
        %437 = vmatpush1.msra.mxu0 0.0
        %438 = vmatprep.subr.mxu0 0.0
        %439 = vmatpush1.msra.mxu0 0.0
        %440 = vmatprep.subr.mxu0 0.0
        %441 = vmatpush1.msra.mxu0 0.0
        %442 = vmatprep.subr.mxu0 0.0
        %443 = vmatpush1.msra.mxu0 0.0
        %444 = vmatprep.subr.mxu0 0.0
        %445 = vmatpush1.msra.mxu0 0.0
        %446 = vmatprep.subr.mxu0 0.0
        %447 = vmatpush1.msra.mxu0 %v306
        %448 = vmatprep.subr.mxu0 0.0
        %449 = vmatpush1.msra.mxu0 %v305
        %450 = vmatprep.subr.mxu0 0.0
        %451 = vmatpush1.msra.mxu0 %v304
        %452 = vmatprep.subr.mxu0 0.0
        %453 = vmatpush1.msra.mxu0 %v303
        %454 = vmatprep.subr.mxu0 0.0
        %455 = vmatpush2.msra.mxu0 0.0
        %456 = vmatprep.subr.mxu0 0.0
        %457 = vmatpush2.msra.mxu0 0.0
        %458 = vmatprep.subr.mxu0 0.0
        %459 = vmatpush2.msra.mxu0 0.0
        %460 = vmatprep.subr.mxu0 0.0
        %461 = vmatpush2.msra.mxu0 0.0
        %462 = vmatprep.subr.mxu0 0.0
        %463 = vmatpush2.msra.mxu0 0.0
        %464 = vmatprep.subr.mxu0 0.0
        %465 = vmatpush2.msra.mxu0 0.0
        %466 = vmatprep.subr.mxu0 0.0
        %467 = vmatpush2.msra.mxu0 0.0
        %468 = vmatprep.subr.mxu0 0.0
        %469 = vmatpush2.msra.mxu0 0.0
        %470 = vmatprep.subr.mxu0 0.0
        %471 = vmatpush2.msra.mxu0 0.0
        %472 = vmatprep.subr.mxu0 0.0
        %473 = vmatpush2.msra.mxu0 0.0
        %474 = vmatprep.subr.mxu0 0.0
        %475 = vmatpush2.msra.mxu0 0.0
        %476 = vmatprep.subr.mxu0 0.0
        %477 = vmatpush2.msra.mxu0 0.0
        %478 = vmatprep.subr.mxu0 0.0
        %479 = vmatpush2.msra.mxu0 0.0
        %480 = vmatprep.subr.mxu0 0.0
        %481 = vmatpush2.msra.mxu0 0.0
        %482 = vmatprep.subr.mxu0 0.0
        %483 = vmatpush2.msra.mxu0 0.0
        %484 = vmatprep.subr.mxu0 0.0
        %485 = vmatpush2.msra.mxu0 0.0
        %486 = vmatprep.mubr.f32.mxu0 0.0
        %487 = vmatmul.mubr.f32.gmra.mxu0 %v420
        %v488 = vpop.f32.mrf.mxu0
        %v489 = vadd.f32 0.0, %v488
        %v490 = vpop.f32.mrf.mxu0
        %491 = vdwg.mxu0
        %v492 = vadd.f32 %v419, %v489
        %v493 = vxor.u32 %v492, 2147483648
        %v494 = vmul.f32 %v493, 1.442695
        %v495 = vpow.pop %v494
        %v496 = vadd.f32 %v495, 1.0
        %v497 = vrcp.pop %v496
        %v498 = vmul.f32 1.0, %v497
        %v499 = vtanh.pop %v492
        %v500 = vmul.f32 %v498, %v406
        %502 = vrot.lane.b32.xlu0 %v499, 64
        %v503 = vpop.permute.xlu0 %502
        %v505 = vmul.f32 %v498, %v503
        %507 = vrot.lane.b32.xlu0 %v505, 32
        %v508 = vpop.permute.xlu0 %507
        %v510 = vadd.f32 %v500, %v508
        %v511 = vtanh.pop %v510
        %513 = vrot.lane.b32.xlu0 %v511, 64
        %v514 = vpop.permute.xlu0 %513
        %v516 = vmul.f32 %v498, %v514
        %518 = vrot.lane.b32.xlu0 %v516, 32
        %v519 = vpop.permute.xlu0 %518
        %s521 = scalar_lea.vmem %s283, 8 [#allocation5]
        %522 = vst.msk [vmem:[%s521] sm:$0xff] %vm310, %v519
        %s523 = scalar_lea.vmem %s254, 16 [#allocation4]
        %v524 = vld [vmem:[%s523] sm:$0xff]
        %v525 = vsel %vm310, %v519, 0
        %527 = vmatprep.subr.mxu0 0.0
        %528 = vmatpush1.msra.mxu0 0.0
        %529 = vmatprep.subr.mxu0 0.0
        %530 = vmatpush1.msra.mxu0 0.0
        %531 = vmatprep.subr.mxu0 0.0
        %532 = vmatpush1.msra.mxu0 0.0
        %533 = vmatprep.subr.mxu0 0.0
        %534 = vmatpush1.msra.mxu0 0.0
        %535 = vmatprep.subr.mxu0 0.0
        %536 = vmatpush1.msra.mxu0 0.0
        %537 = vmatprep.subr.mxu0 0.0
        %538 = vmatpush1.msra.mxu0 0.0
        %539 = vmatprep.subr.mxu0 0.0
        %540 = vmatpush1.msra.mxu0 0.0
        %541 = vmatprep.subr.mxu0 0.0
        %542 = vmatpush1.msra.mxu0 0.0
        %543 = vmatprep.subr.mxu0 0.0
        %544 = vmatpush1.msra.mxu0 0.0
        %545 = vmatprep.subr.mxu0 0.0
        %546 = vmatpush1.msra.mxu0 0.0
        %547 = vmatprep.subr.mxu0 0.0
        %548 = vmatpush1.msra.mxu0 0.0
        %549 = vmatprep.subr.mxu0 0.0
        %550 = vmatpush1.msra.mxu0 0.0
        %551 = vmatprep.subr.mxu0 0.0
        %552 = vmatpush1.msra.mxu0 %v306
        %553 = vmatprep.subr.mxu0 0.0
        %554 = vmatpush1.msra.mxu0 %v305
        %555 = vmatprep.subr.mxu0 0.0
        %556 = vmatpush1.msra.mxu0 %v304
        %557 = vmatprep.subr.mxu0 0.0
        %558 = vmatpush1.msra.mxu0 %v303
        %559 = vmatprep.subr.mxu0 0.0
        %560 = vmatpush2.msra.mxu0 0.0
        %561 = vmatprep.subr.mxu0 0.0
        %562 = vmatpush2.msra.mxu0 0.0
        %563 = vmatprep.subr.mxu0 0.0
        %564 = vmatpush2.msra.mxu0 0.0
        %565 = vmatprep.subr.mxu0 0.0
        %566 = vmatpush2.msra.mxu0 0.0
        %567 = vmatprep.subr.mxu0 0.0
        %568 = vmatpush2.msra.mxu0 0.0
        %569 = vmatprep.subr.mxu0 0.0
        %570 = vmatpush2.msra.mxu0 0.0
        %571 = vmatprep.subr.mxu0 0.0
        %572 = vmatpush2.msra.mxu0 0.0
        %573 = vmatprep.subr.mxu0 0.0
        %574 = vmatpush2.msra.mxu0 0.0
        %575 = vmatprep.subr.mxu0 0.0
        %576 = vmatpush2.msra.mxu0 0.0
        %577 = vmatprep.subr.mxu0 0.0
        %578 = vmatpush2.msra.mxu0 0.0
        %579 = vmatprep.subr.mxu0 0.0
        %580 = vmatpush2.msra.mxu0 0.0
        %581 = vmatprep.subr.mxu0 0.0
        %582 = vmatpush2.msra.mxu0 0.0
        %583 = vmatprep.subr.mxu0 0.0
        %584 = vmatpush2.msra.mxu0 0.0
        %585 = vmatprep.subr.mxu0 0.0
        %586 = vmatpush2.msra.mxu0 0.0
        %587 = vmatprep.subr.mxu0 0.0
        %588 = vmatpush2.msra.mxu0 0.0
        %589 = vmatprep.subr.mxu0 0.0
        %590 = vmatpush2.msra.mxu0 0.0
        %591 = vmatprep.mubr.f32.mxu0 0.0
        %592 = vmatmul.mubr.f32.gmra.mxu0 %v525
        %v593 = vpop.f32.mrf.mxu0
        %v594 = vadd.f32 0.0, %v593
        %v595 = vpop.f32.mrf.mxu0
        %596 = vdwg.mxu0
        %v597 = vadd.f32 %v524, %v594
        %v598 = vxor.u32 %v597, 2147483648
        %v599 = vmul.f32 %v598, 1.442695
        %v600 = vpow.pop %v599
        %v601 = vadd.f32 %v600, 1.0
        %v602 = vrcp.pop %v601
        %v603 = vmul.f32 1.0, %v602
        %v604 = vtanh.pop %v597
        %v605 = vmul.f32 %v603, %v510
        %607 = vrot.lane.b32.xlu0 %v604, 64
        %v608 = vpop.permute.xlu0 %607
        %v610 = vmul.f32 %v603, %v608
        %612 = vrot.lane.b32.xlu0 %v610, 32
        %v613 = vpop.permute.xlu0 %612
        %v615 = vadd.f32 %v605, %v613
        %v616 = vtanh.pop %v615
        %618 = vrot.lane.b32.xlu0 %v616, 64
        %v619 = vpop.permute.xlu0 %618
        %v621 = vmul.f32 %v603, %v619
        %623 = vrot.lane.b32.xlu0 %v621, 32
        %v624 = vpop.permute.xlu0 %623
        %s626 = scalar_lea.vmem %s283, 16 [#allocation5]
        %627 = vst.msk [vmem:[%s626] sm:$0xff] %vm310, %v624
        %s628 = scalar_lea.vmem %s254, 24 [#allocation4]
        %v629 = vld [vmem:[%s628] sm:$0xff]
        %v630 = vsel %vm310, %v624, 0
        %632 = vmatprep.subr.mxu0 0.0
        %633 = vmatpush1.msra.mxu0 0.0
        %634 = vmatprep.subr.mxu0 0.0
        %635 = vmatpush1.msra.mxu0 0.0
        %636 = vmatprep.subr.mxu0 0.0
        %637 = vmatpush1.msra.mxu0 0.0
        %638 = vmatprep.subr.mxu0 0.0
        %639 = vmatpush1.msra.mxu0 0.0
        %640 = vmatprep.subr.mxu0 0.0
        %641 = vmatpush1.msra.mxu0 0.0
        %642 = vmatprep.subr.mxu0 0.0
        %643 = vmatpush1.msra.mxu0 0.0
        %644 = vmatprep.subr.mxu0 0.0
        %645 = vmatpush1.msra.mxu0 0.0
        %646 = vmatprep.subr.mxu0 0.0
        %647 = vmatpush1.msra.mxu0 0.0
        %648 = vmatprep.subr.mxu0 0.0
        %649 = vmatpush1.msra.mxu0 0.0
        %650 = vmatprep.subr.mxu0 0.0
        %651 = vmatpush1.msra.mxu0 0.0
        %652 = vmatprep.subr.mxu0 0.0
        %653 = vmatpush1.msra.mxu0 0.0
        %654 = vmatprep.subr.mxu0 0.0
        %655 = vmatpush1.msra.mxu0 0.0
        %656 = vmatprep.subr.mxu0 0.0
        %657 = vmatpush1.msra.mxu0 %v306
        %658 = vmatprep.subr.mxu0 0.0
        %659 = vmatpush1.msra.mxu0 %v305
        %660 = vmatprep.subr.mxu0 0.0
        %661 = vmatpush1.msra.mxu0 %v304
        %662 = vmatprep.subr.mxu0 0.0
        %663 = vmatpush1.msra.mxu0 %v303
        %664 = vmatprep.subr.mxu0 0.0
        %665 = vmatpush2.msra.mxu0 0.0
        %666 = vmatprep.subr.mxu0 0.0
        %667 = vmatpush2.msra.mxu0 0.0
        %668 = vmatprep.subr.mxu0 0.0
        %669 = vmatpush2.msra.mxu0 0.0
        %670 = vmatprep.subr.mxu0 0.0
        %671 = vmatpush2.msra.mxu0 0.0
        %672 = vmatprep.subr.mxu0 0.0
        %673 = vmatpush2.msra.mxu0 0.0
        %674 = vmatprep.subr.mxu0 0.0
        %675 = vmatpush2.msra.mxu0 0.0
        %676 = vmatprep.subr.mxu0 0.0
        %677 = vmatpush2.msra.mxu0 0.0
        %678 = vmatprep.subr.mxu0 0.0
        %679 = vmatpush2.msra.mxu0 0.0
        %680 = vmatprep.subr.mxu0 0.0
        %681 = vmatpush2.msra.mxu0 0.0
        %682 = vmatprep.subr.mxu0 0.0
        %683 = vmatpush2.msra.mxu0 0.0
        %684 = vmatprep.subr.mxu0 0.0
        %685 = vmatpush2.msra.mxu0 0.0
        %686 = vmatprep.subr.mxu0 0.0
        %687 = vmatpush2.msra.mxu0 0.0
        %688 = vmatprep.subr.mxu0 0.0
        %689 = vmatpush2.msra.mxu0 0.0
        %690 = vmatprep.subr.mxu0 0.0
        %691 = vmatpush2.msra.mxu0 0.0
        %692 = vmatprep.subr.mxu0 0.0
        %693 = vmatpush2.msra.mxu0 0.0
        %694 = vmatprep.subr.mxu0 0.0
        %695 = vmatpush2.msra.mxu0 0.0
        %696 = vmatprep.mubr.f32.mxu0 0.0
        %697 = vmatmul.mubr.f32.gmra.mxu0 %v630
        %v698 = vpop.f32.mrf.mxu0
        %v699 = vadd.f32 0.0, %v698
        %v700 = vpop.f32.mrf.mxu0
        %701 = vdwg.mxu0
        %v702 = vadd.f32 %v629, %v699
        %v703 = vxor.u32 %v702, 2147483648
        %v704 = vmul.f32 %v703, 1.442695
        %v705 = vpow.pop %v704
        %v706 = vadd.f32 %v705, 1.0
        %v707 = vrcp.pop %v706
        %v708 = vmul.f32 1.0, %v707
        %v709 = vtanh.pop %v702
        %v710 = vmul.f32 %v708, %v615
        %712 = vrot.lane.b32.xlu0 %v709, 64
        %v713 = vpop.permute.xlu0 %712
        %v715 = vmul.f32 %v708, %v713
        %717 = vrot.lane.b32.xlu0 %v715, 32
        %v718 = vpop.permute.xlu0 %717
        %v720 = vadd.f32 %v710, %v718
        %v721 = vtanh.pop %v720
        %723 = vrot.lane.b32.xlu0 %v721, 64
        %v724 = vpop.permute.xlu0 %723
        %v726 = vmul.f32 %v708, %v724
        %728 = vrot.lane.b32.xlu0 %v726, 32
        %v729 = vpop.permute.xlu0 %728
        %s731 = scalar_lea.vmem %s283, 24 [#allocation5]
        %732 = vst.msk [vmem:[%s731] sm:$0xff] %vm310, %v729
        %733 = vst.msk [vmem:[#allocation2] sm:$0xff] %vm310, %v729
        %735 = vrot.lane.b32.xlu0 %v720, 96
        %v736 = vpop.permute.xlu0 %735
        %738 = vst.msk [vmem:[#allocation3] sm:$0xff] %vm310, %v736
        %s739 = sand.u32 %s138, 1
        %s740 = sand.u32 %s138, 1
        %s741 = smul.addr %s740, 32
        %s742 = scalar_lea.vmem [#allocation5], %s741
        // Predicated region
        $region79: #{lstm_seq2seq_same.1} parent=69 // pred_check
          %p743 = pneg %p148
        $region80: #{lstm_seq2seq_same.1} parent=69 // pred_check_branch
          %745 = sbr.rel (%p743) target = $region82
        $region81: #{lstm_seq2seq_same.1} parent=69 // pred_region
          %s746 = smul.u32 4, %s20
          %s747 = smul.addr %s746, 2
          %s748 = sadd.s32 %s19, %s747
          %s749 = smul.addr %s748, 8
          %s750 = scalar_lea.vmem %s4, %s749
          // Predicated region
          $region83: #{lstm_seq2seq_same.1} parent=81 // pred_check
            _
          $region84: #{lstm_seq2seq_same.1} parent=81 // pred_check_branch
            %752 = sbr.rel (0) target = $region86
          $region85: #{lstm_seq2seq_same.1} parent=81 // pred_region
            // Predicated region
            $region87: #{lstm_seq2seq_same.1} parent=85 // pred_check
              _
            $region88: #{lstm_seq2seq_same.1} parent=85 // pred_check_branch
              %754 = sbr.rel (0) target = $region90
            $region89: #{lstm_seq2seq_same.1} parent=85 // pred_region
              // Predicated region
              $region102: #{lstm_seq2seq_same.1} parent=89 // pred_check
                _
              $region103: #{lstm_seq2seq_same.1} parent=89 // pred_check_branch
                %776 = sbr.rel (0) target = $region105
              $region104: #{lstm_seq2seq_same.1} parent=89 // pred_region
                loop: start=0, step=1, limit=1
                $region106: #{lstm_seq2seq_same.1} parent=104 // loop_pre_header
                  _
                $region107: #{lstm_seq2seq_same.1} parent=104 // loop_header
                  %s778 = sphi 0, %s782
                  %p779 = scmp.ge.s32.totalorder %s778, 1
                  %s783 = sphi %s742, %s742
                  %s784 = sphi %s750, %s750
                $region108: #{lstm_seq2seq_same.1} parent=104 // loop_header_branch
                  %781 = sbr.rel (%p779) target = $region112
                $region109: #{lstm_seq2seq_same.1} parent=104 // loop_body
                  %v785 = vld [vmem:[%s783] sm:$0xff]
                  %786 = vst [vmem:[%s784] sm:$0xff] %v785
                  %v787 = vld [vmem:[%s783 + $0x8] sm:$0xff]
                  %788 = vst [vmem:[%s784 + $0x10] sm:$0xff] %v787
                  %v789 = vld [vmem:[%s783 + $0x10] sm:$0xff]
                  %790 = vst [vmem:[%s784 + $0x20] sm:$0xff] %v789
                  %v791 = vld [vmem:[%s783 + $0x18] sm:$0xff]
                  %792 = vst [vmem:[%s784 + $0x30] sm:$0xff] %v791
                $region110: #{lstm_seq2seq_same.1} parent=104 // loop_footer
                  %s782 = sadd.s32 1, %s778
                $region111: #{lstm_seq2seq_same.1} parent=104 // loop_footer_branch
                  %777 = sbr.rel target = $region107
                $region112: #{lstm_seq2seq_same.1} parent=104 // loop_exit
                  _
              $region105: #{lstm_seq2seq_same.1} parent=89 // pred_fallthru
                _
              // Predicated region
              $region113: #{lstm_seq2seq_same.1} parent=89 // pred_check
                _
              $region114: #{lstm_seq2seq_same.1} parent=89 // pred_check_branch
                %794 = sbr.rel target = $region116
              $region115: #{lstm_seq2seq_same.1} parent=89 // pred_region
                _
              $region116: #{lstm_seq2seq_same.1} parent=89 // pred_fallthru
                _
            $region90: #{lstm_seq2seq_same.1} parent=85 // pred_fallthru
              _
            // Predicated region
            $region91: #{lstm_seq2seq_same.1} parent=85 // pred_check
              _
            $region92: #{lstm_seq2seq_same.1} parent=85 // pred_check_branch
              %756 = sbr.rel target = $region94
            $region93: #{lstm_seq2seq_same.1} parent=85 // pred_region
              %s758 = ssub.s32 256, 1
              loop: start=0, step=1, limit=1
              $region95: #{lstm_seq2seq_same.1} parent=93 // loop_pre_header
                _
              $region96: #{lstm_seq2seq_same.1} parent=93 // loop_header
                %s760 = sphi 0, %s764
                %p761 = scmp.ge.s32.totalorder %s760, 1
                %s765 = sphi %s742, %s742
                %s766 = sphi %s750, %s750
              $region97: #{lstm_seq2seq_same.1} parent=93 // loop_header_branch
                %763 = sbr.rel (%p761) target = $region101
              $region98: #{lstm_seq2seq_same.1} parent=93 // loop_body
                %v767 = vld [vmem:[%s765] sm:%s758]
                %768 = vst [vmem:[%s766] sm:%s758] %v767
                %v769 = vld [vmem:[%s765 + $0x8] sm:%s758]
                %770 = vst [vmem:[%s766 + $0x10] sm:%s758] %v769
                %v771 = vld [vmem:[%s765 + $0x10] sm:%s758]
                %772 = vst [vmem:[%s766 + $0x20] sm:%s758] %v771
                %v773 = vld [vmem:[%s765 + $0x18] sm:%s758]
                %774 = vst [vmem:[%s766 + $0x30] sm:%s758] %v773
              $region99: #{lstm_seq2seq_same.1} parent=93 // loop_footer
                %s764 = sadd.s32 1, %s760
              $region100: #{lstm_seq2seq_same.1} parent=93 // loop_footer_branch
                %759 = sbr.rel target = $region96
              $region101: #{lstm_seq2seq_same.1} parent=93 // loop_exit
                _
            $region94: #{lstm_seq2seq_same.1} parent=85 // pred_fallthru
              _
          $region86: #{lstm_seq2seq_same.1} parent=81 // pred_fallthru
            _
          %795 = vnop
        $region82: #{lstm_seq2seq_same.1} parent=69 // pred_fallthru
          _
      $region70: #{lstm_seq2seq_same.1} parent=5 // pred_fallthru
        _
      %p796 = scmp.le.s32.totalorder 2, %s10
      // Predicated region
      $region117: #{lstm_seq2seq_same.1} parent=5 // pred_check
        %p797 = pneg %p796
      $region118: #{lstm_seq2seq_same.1} parent=5 // pred_check_branch
        %799 = sbr.rel (%p797) target = $region120
      $region119: #{lstm_seq2seq_same.1} parent=5 // pred_region
        %s800 = ssub.s32 %s10, 2
        // Predicated region
        $region121: #{lstm_seq2seq_same.1} parent=119 // pred_check
          %p801 = pneg %p154
        $region122: #{lstm_seq2seq_same.1} parent=119 // pred_check_branch
          %803 = sbr.rel (%p801) target = $region124
        $region123: #{lstm_seq2seq_same.1} parent=119 // pred_region
          %s804 = sand.u32 %s139, 1
          %s805 = sand.u32 %s139, 1
          %s806 = smul.addr %s805, 32
          %s807 = scalar_lea.vmem [#allocation5], %s806
        $region124: #{lstm_seq2seq_same.1} parent=119 // pred_fallthru
          _
      $region120: #{lstm_seq2seq_same.1} parent=5 // pred_fallthru
        _
    $region6: #{lstm_seq2seq_same.1} parent=1 // loop_footer
      %s14 = sadd.s32 1, %s10
    $region7: #{lstm_seq2seq_same.1} parent=1 // loop_footer_branch
      %9 = sbr.rel target = $region3
    $region8: #{lstm_seq2seq_same.1} parent=1 // loop_exit
      _

</llo_original>
